<compile_context>
chip_gen: v5e
topology: v5e:2x2
jax: 0.10.0
libtpu: 0.0.40
codegen_flags: <defaults>
</compile_context>

<pallas_src>
import functools

import jax
import jax.numpy as jnp
from jax.experimental import pallas as pl
from jax.experimental.pallas import tpu as pltpu


def _shortcut_kernel(x_ref, o_ref, t_ref, *, n_tile, rows_mid, pad_rows, w_out):
    # x_ref: (n_tile * C_in * H, W)        fused (sample, channel, row) x W
    # o_ref: (n_tile * C_out * H_out, W_out)
    # t_ref: (W, n_tile * C_in * H_out)    VMEM scratch for the W subsample
    #
    # 1) even-H rows for every (sample, channel) in the block.  Because H is
    #    even, "even fused row" == "even h", so one sublane-strided read does
    #    the whole H subsample for the block.
    xh = x_ref[pl.ds(0, n_tile * rows_mid, 2), :]          # (n_tile*rows_mid, W)

    # 2) stride-2 W subsample: move W onto the sublane dim (XLU transpose),
    #    strided-read from scratch, transpose back.  Pure data movement.
    t_ref[...] = xh.T                                      # (W, n_tile*rows_mid)
    xs = t_ref[pl.ds(0, w_out, 2), :].T                    # (n_tile*rows_mid, W_out)

    # 3) channel zero-pad, assembled in registers -> single full-block store.
    if pad_rows == 0:
        o_ref[...] = xs
    else:
        z = jnp.zeros((pad_rows, w_out), o_ref.dtype)
        pieces = []
        for t in range(n_tile):                            # static unroll
            pieces.extend((z, xs[t * rows_mid:(t + 1) * rows_mid, :], z))
        o_ref[...] = jnp.concatenate(pieces, axis=0)


def _pick_batch_tile(n, r_in, r_out, per_sample_bytes,
                     max_block_bytes=2 * 1024 * 1024):
    """Largest divisor of n that keeps blocks small, legal, and >=2 grid steps."""
    best = None
    for d in range(1, n + 1):
        if n % d:
            continue
        if d > 1 and d * per_sample_bytes > max_block_bytes:
            break
        if n >= 2 and n // d < 2:       # keep a parallel axis for v7x megacore
            break
        if (d * r_in) % 8 == 0 and (d * r_out) % 8 == 0:   # sublane tiling rule
            best = d
    return best if best is not None else n   # full-extent block is always legal


def lambda_layer_forward(x_nchw, planes):
    """Option-A shortcut: x[:, :, ::2, ::2] zero-padded to `planes` channels (NCHW)."""
    n, c_in, h, w = x_nchw.shape
    assert h % 2 == 0 and w % 2 == 0, "option-A shortcut assumes even H, W"
    pad = planes // 4
    c_out = c_in + 2 * pad
    h_out, w_out = h // 2, w // 2
    r_in, r_out = c_in * h, c_out * h_out
    rows_mid = c_in * h_out
    dtype = x_nchw.dtype
    itemsize = jnp.dtype(dtype).itemsize

    per_sample_bytes = (r_in * w + r_out * w_out) * itemsize
    n_tile = _pick_batch_tile(n, r_in, r_out, per_sample_bytes)
    grid = (n // n_tile,)

    # Free, layout-preserving reshape (no transpose, no data movement).
    x2 = x_nchw.reshape(n * r_in, w)

    kernel = functools.partial(
        _shortcut_kernel,
        n_tile=n_tile, rows_mid=rows_mid, pad_rows=pad * h_out, w_out=w_out,
    )

    bytes_accessed = (n * r_in * w + n * r_out * w_out) * itemsize

    out2 = pl.pallas_call(
        kernel,
        out_shape=jax.ShapeDtypeStruct((n * r_out, w_out), dtype),
        grid=grid,
        in_specs=[pl.BlockSpec((n_tile * r_in, w), lambda i: (i, 0))],
        out_specs=pl.BlockSpec((n_tile * r_out, w_out), lambda i: (i, 0)),
        scratch_shapes=[pltpu.VMEM((w, n_tile * rows_mid), dtype)],
        compiler_params=pltpu.CompilerParams(dimension_semantics=("parallel",)),
        cost_estimate=pl.CostEstimate(
            flops=0, transcendentals=0, bytes_accessed=bytes_accessed),
    )(x2)

    # Free reshape back to NCHW.
    return out2.reshape(n, c_out, h_out, w_out)


if __name__ == "__main__":
    key = jax.random.PRNGKey(0)
    x = jax.random.normal(key, (2, 4, 16, 16), dtype=jnp.float32)   # NCHW
    planes = 8                                                      # pad 2 channels each side

    out = jax.block_until_ready(lambda_layer_forward(x, planes))

    # pure-JAX reference of the same lambda (exact data movement -> exact match)
    pad = planes // 4
    ref = jnp.pad(x[:, :, ::2, ::2], ((0, 0), (pad, pad), (0, 0), (0, 0)))

    assert out.shape == ref.shape == (2, 8, 8, 8), out.shape
    assert jnp.array_equal(out, ref), "mismatch vs reference"
    print("KERNEL_OK")
</pallas_src>

<mosaic_0001>
module attributes {stable_mosaic.version = 11 : i64} {
  func.func @_shortcut_kernel(%arg0: i32, %arg1: memref<64x16xf32, #tpu.memory_space<vmem>>, %arg2: memref<64x8xf32, #tpu.memory_space<vmem>>, %arg3: memref<16x32xf32, #tpu.memory_space<vmem>>) attributes {dimension_semantics = [#tpu.dimension_semantics<parallel>], iteration_bounds = array<i64: 2>, scalar_prefetch = 0 : i64, scratch_operands = 1 : i64, tpu.core_type = #tpu.core_type<tc>, window_params = [{transform_indices = @transform_0, window_bounds = array<i64: 64, 16>}, {transform_indices = @transform_1, window_bounds = array<i64: 64, 8>}]} {
    %c0 = arith.constant 0 : index
    %c0_0 = arith.constant 0 : index
    %0 = tpu.strided_load %arg1[%c0, %c0_0] {strides = array<i32: 2, 1>} : memref<64x16xf32, #tpu.memory_space<vmem>>, vector<32x16xf32>
    %1 = tpu.transpose %0, [1, 0] : vector<32x16xf32> -> vector<16x32xf32>
    %c0_1 = arith.constant 0 : index
    %c0_2 = arith.constant 0 : index
    %2 = vector.load %arg3[%c0_1, %c0_2] : memref<16x32xf32, #tpu.memory_space<vmem>>, vector<16x32xf32>
    tpu.vector_store %arg3[%c0_1, %c0_2], %1 {strides = array<i32>} : memref<16x32xf32, #tpu.memory_space<vmem>>, vector<16x32xf32>,
    %c0_3 = arith.constant 0 : index
    %c0_4 = arith.constant 0 : index
    %3 = tpu.strided_load %arg3[%c0_3, %c0_4] {strides = array<i32: 2, 1>} : memref<16x32xf32, #tpu.memory_space<vmem>>, vector<8x32xf32>
    %4 = tpu.transpose %3, [1, 0] : vector<8x32xf32> -> vector<32x8xf32>
    %cst = arith.constant 0.000000e+00 : f32
    %5 = vector.broadcast %cst : f32 to vector<16x8xf32>
    %6 = tpu.concatenate %5, %4, %5 in 0 : vector<16x8xf32>, vector<32x8xf32>, vector<16x8xf32> -> vector<64x8xf32>
    %c0_5 = arith.constant 0 : index
    %c0_6 = arith.constant 0 : index
    %7 = vector.load %arg2[%c0_5, %c0_6] : memref<64x8xf32, #tpu.memory_space<vmem>>, vector<64x8xf32>
    tpu.vector_store %arg2[%c0_5, %c0_6], %6 {strides = array<i32>} : memref<64x8xf32, #tpu.memory_space<vmem>>, vector<64x8xf32>,
    return
  }
  func.func @transform_0(%arg0: i32) -> (i32, i32) {
    %c0_i32 = arith.constant 0 : i32
    %c0_i32_0 = arith.constant 0 : i32
    return %arg0, %c0_i32 : i32, i32
  }
  func.func @transform_1(%arg0: i32) -> (i32, i32) {
    %c0_i32 = arith.constant 0 : i32
    %c0_i32_0 = arith.constant 0 : i32
    return %arg0, %c0_i32 : i32, i32
  }
}

</mosaic_0001>

<llo_original>
// kernel: tpu_custom_call.1
$region0: #{tpu_custom_call.1}
  #allocation0 [shape = 'u32[]', space=smem, size = 0x4, offset = 0x4, fixed_abs, tag = 'smem constant byte address 0x4 - core index']
  #allocation1 [shape = 'u32[72,128]{1,0:T(1,128)}', space=vmem, size = 0x9000, scoped, tag = 'internal scratch']
  #allocation2 [shape = 'f32[16,32]{1,0:T(8,128)}', space=vmem, size = 0x2000, scoped, tag = 'scratch operand']
  %s0 = inlined_call_operand.vmem [shape: f32[128,16], index: 0, kind: input, shape index: {}]
  %s1 = inlined_call_operand.vmem [shape: f32[128,8], index: 1, kind: output, shape index: {}]
  %s2 = sld [smem:[#allocation0]]
  $region37: #{tpu_custom_call.1} parent=0
    _
  %s4 = ssub.s32 1, %s2
  %s5 = scalar_select 0, %s4, %s2
  loop: start=0, step=1, limit=4
  $region2: #{tpu_custom_call.1} parent=0 // loop_pre_header
    _
  $region3: #{tpu_custom_call.1} parent=0 // loop_header
    %s7 = sphi 0, %s11
    %p8 = scmp.ge.s32.totalorder %s7, 4
    %s17 = sphi 0, %s19
    %s20 = sphi 0, %s17
    %s21 = sphi 0, %s20
    %s37 = sphi 0, %s21
    %s43 = sphi 0, %s45
    %s46 = sphi 0, %s43
    %s47 = sphi 0, %s46
    %s63 = sphi 0, %s47
  $region4: #{tpu_custom_call.1} parent=0 // loop_header_branch
    %10 = sbr.rel (%p8) target = $region8
  $region5: #{tpu_custom_call.1} parent=0 // loop_body
    %s12 = ssub.s32 %s7, 1
    %s13 = ssub.s32 %s7, 2
    %s14 = sadd.s32 %s7, 1
    %s15 = ssub.s32 %s7, %s14
    %p16 = scmp.eq.s32.totalorder %s15, 0
    %s18 = sadd.s32 %s17, 1
    %s19 = scalar_select %p16, %s17, %s18
    %p22 = pneg %p16
    %p23 = scmp.eq.s32.totalorder %s7, 1
    %p24 = por %p22, %p23
    %p25 = scmp.ne.s32.totalorder %s17, %s20
    %p26 = scmp.eq.s32.totalorder %s7, 0
    %p27 = por %p25, %p26
    %p28 = scmp.ne.s32.totalorder %s17, %s20
    %p29 = scmp.eq.s32.totalorder %s12, 1
    %p30 = por %p28, %p29
    %p31 = scmp.ne.s32.totalorder %s20, %s21
    %p32 = scmp.eq.s32.totalorder %s12, 0
    %p33 = por %p31, %p32
    %p34 = scmp.ne.s32.totalorder %s20, %s21
    %p35 = scmp.eq.s32.totalorder %s13, 1
    %p36 = por %p34, %p35
    %p38 = scmp.ne.s32.totalorder %s21, %s37
    %p39 = scmp.eq.s32.totalorder %s13, 0
    %p40 = por %p38, %p39
    %s41 = ssub.s32 %s7, %s14
    %p42 = scmp.eq.s32.totalorder %s41, 0
    %s44 = sadd.s32 %s43, 1
    %s45 = scalar_select %p42, %s43, %s44
    %p48 = pneg %p42
    %p49 = scmp.eq.s32.totalorder %s7, 1
    %p50 = por %p48, %p49
    %p51 = scmp.ne.s32.totalorder %s43, %s46
    %p52 = scmp.eq.s32.totalorder %s7, 0
    %p53 = por %p51, %p52
    %p54 = scmp.ne.s32.totalorder %s43, %s46
    %p55 = scmp.eq.s32.totalorder %s12, 1
    %p56 = por %p54, %p55
    %p57 = scmp.ne.s32.totalorder %s46, %s47
    %p58 = scmp.eq.s32.totalorder %s12, 0
    %p59 = por %p57, %p58
    %p60 = scmp.ne.s32.totalorder %s46, %s47
    %p61 = scmp.eq.s32.totalorder %s13, 1
    %p62 = por %p60, %p61
    %p64 = scmp.ne.s32.totalorder %s47, %s63
    %p65 = scmp.eq.s32.totalorder %s13, 0
    %p66 = por %p64, %p65
    %p67 = scmp.le.s32.totalorder 1, %s7
    %p68 = scmp.lt.s32.totalorder %s7, 3
    %p69 = pnand %p67, %p68
    %p70 = pneg %p69
    // Predicated region
    $region9: #{tpu_custom_call.1} parent=5 // pred_check
      _
    $region10: #{tpu_custom_call.1} parent=5 // pred_check_branch
      %72 = sbr.rel (%p69) target = $region12
    $region11: #{tpu_custom_call.1} parent=5 // pred_region
      %s73 = ssub.s32 %s7, 1
    $region12: #{tpu_custom_call.1} parent=5 // pred_fallthru
      _
    %p74 = scmp.lt.s32.totalorder %s7, 2
    // Predicated region
    $region13: #{tpu_custom_call.1} parent=5 // pred_check
      %p75 = pneg %p74
    $region14: #{tpu_custom_call.1} parent=5 // pred_check_branch
      %77 = sbr.rel (%p75) target = $region16
    $region15: #{tpu_custom_call.1} parent=5 // pred_region
      // Predicated region
      $region17: #{tpu_custom_call.1} parent=15 // pred_check
        %p78 = pneg %p27
      $region18: #{tpu_custom_call.1} parent=15 // pred_check_branch
        %80 = sbr.rel (%p78) target = $region20
      $region19: #{tpu_custom_call.1} parent=15 // pred_region
        %s81 = smul.u32 8, %s7
        %p82 = scmp.lt.s32.totalorder %s81, 15
        %s83 = scalar_select %p82, %s81, 15
        %s84 = smul.addr %s83, 8
        %s85 = scalar_lea.vmem %s0, %s84
        %s86 = smul.u32 8, %s7
      $region20: #{tpu_custom_call.1} parent=15 // pred_fallthru
        _
    $region16: #{tpu_custom_call.1} parent=5 // pred_fallthru
      _
    %p87 = scmp.le.s32.totalorder 1, %s7
    %p88 = scmp.lt.s32.totalorder %s7, 3
    %p89 = pnand %p87, %p88
    %p90 = pneg %p89
    // Predicated region
    $region21: #{tpu_custom_call.1} parent=5 // pred_check
      _
    $region22: #{tpu_custom_call.1} parent=5 // pred_check_branch
      %92 = sbr.rel (%p89) target = $region24
    $region23: #{tpu_custom_call.1} parent=5 // pred_region
      %s93 = ssub.s32 %s7, 1
      %s94 = smul.u32 8, %s12
      %p95 = scmp.lt.s32.totalorder %s94, 15
      %s96 = scalar_select %p95, %s94, 15
      %s97 = smul.addr %s96, 8
      %s98 = scalar_lea.vmem %s0, %s97
      %p99 = pneg %p33
      %p100 = pneg %p30
      %p101 = pneg %p59
      %p102 = pneg %p56
      %s103 = smul.u32 8, %s12
      %p104 = scmp.lt.s32.totalorder %s103, 15
      %s105 = scalar_select %p104, %s103, 15
      %s106 = smul.addr %s105, 8
      %s107 = scalar_lea.vmem %s1, %s106
      %s108 = smul.u32 8, %s12
      %p109 = scmp.lt.s32.totalorder %s108, 15
      %s110 = scalar_select %p109, %s108, 15
      %s111 = smul.addr %s110, 8
      %s112 = scalar_lea.vmem %s0, %s111
      %s113 = smul.u32 8, %s12
      %s114 = smul.u32 8, %s12
      %p115 = scmp.lt.s32.totalorder %s114, 15
      %s116 = scalar_select %p115, %s114, 15
      %s117 = smul.addr %s116, 8
      %s118 = scalar_lea.vmem %s1, %s117
      %s119 = smul.u32 8, %s12
      %v120 = vld [vmem:[%s112] ss:$2 sm:$0xff]
      %s121 = scalar_lea.vmem %s112, 16
      %v122 = vld [vmem:[%s121] ss:$2 sm:$0xff]
      %s123 = scalar_lea.vmem %s112, 32
      %v124 = vld [vmem:[%s123] ss:$2 sm:$0xff]
      %s125 = scalar_lea.vmem %s112, 48
      %v126 = vld [vmem:[%s125] ss:$2 sm:$0xff]
      %127 = vxpose.xlu0.b32.start [1/16] %v120, 128
      %128 = vxpose.xlu0.b32.cont [2/16] %v122, 128
      %129 = vxpose.xlu0.b32.cont [3/16] %v124, 128
      %130 = vxpose.xlu0.b32.cont [4/16] %v126, 128
      %131 = vxpose.xlu0.b32.cont [5/16] 0.0, 128
      %132 = vxpose.xlu0.b32.cont [6/16] 0.0, 128
      %133 = vxpose.xlu0.b32.cont [7/16] 0.0, 128
      %134 = vxpose.xlu0.b32.cont [8/16] 0.0, 128
      %135 = vxpose.xlu0.b32.cont [9/16] 0.0, 128
      %136 = vxpose.xlu0.b32.cont [10/16] 0.0, 128
      %137 = vxpose.xlu0.b32.cont [11/16] 0.0, 128
      %138 = vxpose.xlu0.b32.cont [12/16] 0.0, 128
      %139 = vxpose.xlu0.b32.cont [13/16] 0.0, 128
      %140 = vxpose.xlu0.b32.cont [14/16] 0.0, 128
      %141 = vxpose.xlu0.b32.cont [15/16] 0.0, 128
      %142 = vxpose.xlu0.b32.end [16/16] 0.0, 128
      %v143 = vpop.trf.xlu0
      %v144 = vpop.trf.xlu0
      %v145 = vpop.trf.xlu0
      %v146 = vpop.trf.xlu0
      %v147 = vpop.trf.xlu0
      %v148 = vpop.trf.xlu0
      %v149 = vpop.trf.xlu0
      %v150 = vpop.trf.xlu0
      %v151 = vpop.trf.xlu0
      %v152 = vpop.trf.xlu0
      %v153 = vpop.trf.xlu0
      %v154 = vpop.trf.xlu0
      %v155 = vpop.trf.xlu0
      %v156 = vpop.trf.xlu0
      %v157 = vpop.trf.xlu0
      %v158 = vpop.trf.xlu0
      %vm159 = vcmask 261120
      %160 = vst.msk [vmem:[#allocation2] sm:$0xff] %vm159, %v143
      %161 = vst.msk [vmem:[#allocation2 + $0x8] sm:$0xff] %vm159, %v144
      %v162 = vld [vmem:[#allocation2] ss:$2 sm:$0xff]
      %163 = vxpose.xlu0.b32.start [1/16] %v162, 128
      %164 = vxpose.xlu0.b32.cont [2/16] 0.0, 128
      %165 = vxpose.xlu0.b32.cont [3/16] 0.0, 128
      %166 = vxpose.xlu0.b32.cont [4/16] 0.0, 128
      %167 = vxpose.xlu0.b32.cont [5/16] 0.0, 128
      %168 = vxpose.xlu0.b32.cont [6/16] 0.0, 128
      %169 = vxpose.xlu0.b32.cont [7/16] 0.0, 128
      %170 = vxpose.xlu0.b32.cont [8/16] 0.0, 128
      %171 = vxpose.xlu0.b32.cont [9/16] 0.0, 128
      %172 = vxpose.xlu0.b32.cont [10/16] 0.0, 128
      %173 = vxpose.xlu0.b32.cont [11/16] 0.0, 128
      %174 = vxpose.xlu0.b32.cont [12/16] 0.0, 128
      %175 = vxpose.xlu0.b32.cont [13/16] 0.0, 128
      %176 = vxpose.xlu0.b32.cont [14/16] 0.0, 128
      %177 = vxpose.xlu0.b32.cont [15/16] 0.0, 128
      %178 = vxpose.xlu0.b32.end [16/16] 0.0, 128
      %v179 = vpop.trf.xlu0
      %v180 = vpop.trf.xlu0
      %v181 = vpop.trf.xlu0
      %v182 = vpop.trf.xlu0
      %v183 = vpop.trf.xlu0
      %v184 = vpop.trf.xlu0
      %v185 = vpop.trf.xlu0
      %v186 = vpop.trf.xlu0
      %v187 = vpop.trf.xlu0
      %v188 = vpop.trf.xlu0
      %v189 = vpop.trf.xlu0
      %v190 = vpop.trf.xlu0
      %v191 = vpop.trf.xlu0
      %v192 = vpop.trf.xlu0
      %v193 = vpop.trf.xlu0
      %v194 = vpop.trf.xlu0
      %vm195 = vcmask 64512
      %196 = vst.msk [vmem:[%s118] sm:$0xff] %vm195, 0.0
      %197 = vst.msk [vmem:[%s118 + $0x8] sm:$0xff] %vm195, 0.0
      %198 = vst.msk [vmem:[%s118 + $0x10] sm:$0xff] %vm195, %v179
      %199 = vst.msk [vmem:[%s118 + $0x18] sm:$0xff] %vm195, %v180
      %200 = vst.msk [vmem:[%s118 + $0x20] sm:$0xff] %vm195, %v181
      %201 = vst.msk [vmem:[%s118 + $0x28] sm:$0xff] %vm195, %v182
      %202 = vst.msk [vmem:[%s118 + $0x30] sm:$0xff] %vm195, 0.0
      %203 = vst.msk [vmem:[%s118 + $0x38] sm:$0xff] %vm195, 0.0
      %s204 = smul.u32 8, %s12
      %p205 = scmp.lt.s32.totalorder %s204, 15
      %s206 = scalar_select %p205, %s204, 15
      %s207 = smul.addr %s206, 8
      %s208 = scalar_lea.vmem %s1, %s207
      // Predicated region
      $region25: #{tpu_custom_call.1} parent=23 // pred_check
        %p209 = pneg %p56
      $region26: #{tpu_custom_call.1} parent=23 // pred_check_branch
        %211 = sbr.rel (%p209) target = $region28
      $region27: #{tpu_custom_call.1} parent=23 // pred_region
        %s212 = smul.u32 8, %s12
      $region28: #{tpu_custom_call.1} parent=23 // pred_fallthru
        _
    $region24: #{tpu_custom_call.1} parent=5 // pred_fallthru
      _
    %p213 = scmp.le.s32.totalorder 2, %s7
    // Predicated region
    $region29: #{tpu_custom_call.1} parent=5 // pred_check
      %p214 = pneg %p213
    $region30: #{tpu_custom_call.1} parent=5 // pred_check_branch
      %216 = sbr.rel (%p214) target = $region32
    $region31: #{tpu_custom_call.1} parent=5 // pred_region
      %s217 = ssub.s32 %s7, 2
      // Predicated region
      $region33: #{tpu_custom_call.1} parent=31 // pred_check
        %p218 = pneg %p62
      $region34: #{tpu_custom_call.1} parent=31 // pred_check_branch
        %220 = sbr.rel (%p218) target = $region36
      $region35: #{tpu_custom_call.1} parent=31 // pred_region
        %s221 = smul.u32 8, %s13
        %p222 = scmp.lt.s32.totalorder %s221, 15
        %s223 = scalar_select %p222, %s221, 15
        %s224 = smul.addr %s223, 8
        %s225 = scalar_lea.vmem %s1, %s224
      $region36: #{tpu_custom_call.1} parent=31 // pred_fallthru
        _
    $region32: #{tpu_custom_call.1} parent=5 // pred_fallthru
      _
  $region6: #{tpu_custom_call.1} parent=0 // loop_footer
    %s11 = sadd.s32 1, %s7
  $region7: #{tpu_custom_call.1} parent=0 // loop_footer_branch
    %6 = sbr.rel target = $region3
  $region8: #{tpu_custom_call.1} parent=0 // loop_exit
    _

</llo_original>
